<compile_context>
chip_gen: v7x
topology: tpu7x:2x2x1
jax: 0.10.0
libtpu: 0.0.40
codegen_flags: <defaults>
</compile_context>

<pallas_src>
import math

import jax
import jax.numpy as jnp
from jax.experimental import pallas as pl
from jax.experimental.pallas import tpu as pltpu


def siamese_kernel(xs_ref, we_ref, be_ref, w1a_ref, w1b_ref, b1_ref,
                   w2_ref, b2_ref, out_ref):
    tb = out_ref.shape[0]

    # Shared encoder for BOTH branches in one MXU matmul:
    # xs rows [0, tb) are the x1 tile, rows [tb, 2*tb) are the x2 tile.
    e = jnp.dot(xs_ref[...], we_ref[...], preferred_element_type=jnp.float32)
    e = jnp.maximum(e + be_ref[...], 0.0)            # encoder Linear + ReLU
    e1 = e[:tb, :].astype(w1a_ref.dtype)
    e2 = e[tb:, :].astype(w1b_ref.dtype)

    # fc[0]: Linear(2E, 256) with the concat folded into two matmuls:
    # cat(e1, e2) @ W1 == e1 @ W1[:E, :] + e2 @ W1[E:, :]
    h = (jnp.dot(e1, w1a_ref[...], preferred_element_type=jnp.float32)
         + jnp.dot(e2, w1b_ref[...], preferred_element_type=jnp.float32)
         + b1_ref[...])
    h = jnp.maximum(h, 0.0)                          # fc[1]: ReLU

    # fc[2]: Linear(256, 1) as a lane reduction (avoids an N=1 MXU matmul),
    # then Sigmoid.  b2 is a scalar read from SMEM.
    logit = jnp.sum(h * w2_ref[...], axis=-1, keepdims=True) + b2_ref[0, 0]
    out_ref[...] = jax.nn.sigmoid(logit).astype(out_ref.dtype)


def siamese_forward(x1, x2, params, *, tb=128):
    """x1, x2: (B, C, H, W) float32.  Returns (B, 1) float32 sigmoid scores."""
    # tb=128 is a good default on v5e; 256 also works well on v6e/v7x.
    B = x1.shape[0]
    D = x1.shape[1] * x1.shape[2] * x1.shape[3]
    we, be, w1a, w1b, b1, w2, b2 = params
    E = we.shape[1]
    HID = b1.shape[1]

    # Pad the batch to sublane (8) / tile granularity so all blocks are aligned.
    b_pad = max(8, -(-B // 8) * 8)
    tb = min(tb, b_pad)
    b_pad = -(-b_pad // tb) * tb
    g = b_pad // tb

    def prep(x):
        xf = x.reshape(B, -1)                        # matches output.view(B, -1)
        return jnp.pad(xf, ((0, b_pad - B), (0, 0)))

    x1p = prep(x1)
    x2p = prep(x2)
    # Block-interleave the two branches: grid step i sees its x1 tile stacked
    # on top of its x2 tile -> one (2*tb, D) encoder matmul per step.
    xs = jnp.stack([x1p.reshape(g, tb, D), x2p.reshape(g, tb, D)], axis=1)
    xs = xs.reshape(2 * b_pad, D).astype(jnp.bfloat16)

    we_b = we.astype(jnp.bfloat16)
    w1a_b = w1a.astype(jnp.bfloat16)
    w1b_b = w1b.astype(jnp.bfloat16)

    def const(shape):
        # Weight/bias blocks stay VMEM-resident across grid steps.
        return pl.BlockSpec(shape, lambda i: (0,) * len(shape))

    out_pad = pl.pallas_call(
        siamese_kernel,
        out_shape=jax.ShapeDtypeStruct((b_pad, 1), jnp.float32),
        grid=(g,),
        in_specs=[
            pl.BlockSpec((2 * tb, D), lambda i: (i, 0)),        # stacked x1/x2 tile
            const((D, E)),                                      # encoder weight
            const((1, E)),                                      # encoder bias
            const((E, HID)),                                    # fc[0] weight (top half)
            const((E, HID)),                                    # fc[0] weight (bottom half)
            const((1, HID)),                                    # fc[0] bias
            const((1, HID)),                                    # fc[2] weight (row vector)
            pl.BlockSpec(memory_space=pltpu.MemorySpace.SMEM),  # fc[2] bias scalar
        ],
        out_specs=pl.BlockSpec((tb, 1), lambda i: (i, 0)),
        compiler_params=pltpu.CompilerParams(
            dimension_semantics=("parallel",),
            vmem_limit_bytes=32 * 1024 * 1024,
        ),
    )(xs, we_b, be, w1a_b, w1b_b, b1, w2, b2)
    return out_pad[:B]


def xavier_uniform(key, fan_in, fan_out):
    bound = math.sqrt(6.0 / (fan_in + fan_out))
    return jax.random.uniform(key, (fan_in, fan_out), jnp.float32,
                              minval=-bound, maxval=bound)


def init_params(key, in_features, enc_features, hidden=256, enc_pad=128):
    """Deterministic xavier_uniform weights, biases filled with 0.01
    (mirrors SiameseNetwork.init_weights for nn.Linear).  The encoder output
    dim is zero-padded to `enc_pad` for lane-dense MXU tiles (exact results)."""
    k_enc, k_fc1, k_fc2 = jax.random.split(key, 3)
    pad_e = enc_pad - enc_features

    we = xavier_uniform(k_enc, in_features, enc_features)
    we = jnp.pad(we, ((0, 0), (0, pad_e)))
    be = jnp.zeros((1, enc_pad), jnp.float32).at[:, :enc_features].set(0.01)

    # fc[0]: Linear(2*enc_features, hidden); split along the input axis so the
    # kernel can fold the concat into two matmuls; pad rows with zeros.
    w1 = xavier_uniform(k_fc1, 2 * enc_features, hidden)
    w1a = jnp.pad(w1[:enc_features, :], ((0, pad_e), (0, 0)))
    w1b = jnp.pad(w1[enc_features:, :], ((0, pad_e), (0, 0)))
    b1 = jnp.full((1, hidden), 0.01, jnp.float32)

    # fc[2]: Linear(hidden, 1) stored as a (1, hidden) row for the VPU reduction.
    w2 = xavier_uniform(k_fc2, hidden, 1).T
    b2 = jnp.full((1, 1), 0.01, jnp.float32)
    return (we, be, w1a, w1b, b1, w2, b2)


def reference_forward(x1, x2, params):
    """Pure-JAX reference of the same forward pass, mirroring the kernel's
    bf16 casts (f32 accumulation), for a sanity check."""
    we, be, w1a, w1b, b1, w2, b2 = params
    B = x1.shape[0]

    def bf16_round(a):
        return a.astype(jnp.bfloat16).astype(jnp.float32)

    x1f = bf16_round(x1.reshape(B, -1))
    x2f = bf16_round(x2.reshape(B, -1))
    we_ = bf16_round(we)
    w1a_ = bf16_round(w1a)
    w1b_ = bf16_round(w1b)

    e1 = jnp.maximum(x1f @ we_ + be, 0.0)
    e2 = jnp.maximum(x2f @ we_ + be, 0.0)
    h = jnp.maximum(bf16_round(e1) @ w1a_ + bf16_round(e2) @ w1b_ + b1, 0.0)
    logit = jnp.sum(h * w2, axis=-1, keepdims=True) + b2[0, 0]
    return jax.nn.sigmoid(logit)


if __name__ == "__main__":
    # Small shapes consistent with an image-pair siamese net.
    B, C, H, W = 2, 4, 16, 16
    ENC = 32  # encoded_features (zero-padded to 128 lanes internally)

    key = jax.random.PRNGKey(0)
    k_x1, k_x2, k_p = jax.random.split(key, 3)
    x1 = jax.random.normal(k_x1, (B, C, H, W), jnp.float32)
    x2 = jax.random.normal(k_x2, (B, C, H, W), jnp.float32)

    params = init_params(k_p, C * H * W, ENC)

    out = siamese_forward(x1, x2, params)
    out = jax.block_until_ready(out)

    ref = reference_forward(x1, x2, params)
    assert out.shape == (B, 1), out.shape
    assert jnp.allclose(out, ref, atol=1e-2, rtol=1e-2), (out, ref)

    print("KERNEL_OK")
</pallas_src>

<mosaic_0001>
module attributes {stable_mosaic.version = 11 : i64} {
  func.func @siamese_kernel(%arg0: i32, %arg1: memref<16x1024xbf16, #tpu.memory_space<vmem>>, %arg2: memref<1024x128xbf16, #tpu.memory_space<vmem>>, %arg3: memref<1x128xf32, #tpu.memory_space<vmem>>, %arg4: memref<128x256xbf16, #tpu.memory_space<vmem>>, %arg5: memref<128x256xbf16, #tpu.memory_space<vmem>>, %arg6: memref<1x256xf32, #tpu.memory_space<vmem>>, %arg7: memref<1x256xf32, #tpu.memory_space<vmem>>, %arg8: memref<1x1xf32, #tpu.memory_space<smem>>, %arg9: memref<8x1xf32, #tpu.memory_space<vmem>>) attributes {dimension_semantics = [#tpu.dimension_semantics<parallel>], iteration_bounds = array<i64: 1>, scalar_prefetch = 0 : i64, scratch_operands = 0 : i64, tpu.core_type = #tpu.core_type<tc>, window_params = [{transform_indices = @transform_0, window_bounds = array<i64: 16, 1024>}, {pipeline_mode = #tpu.pipeline_mode<synchronous>, transform_indices = @transform_1, window_bounds = array<i64: 1024, 128>}, {pipeline_mode = #tpu.pipeline_mode<synchronous>, transform_indices = @transform_2, window_bounds = array<i64: 1, 128>}, {pipeline_mode = #tpu.pipeline_mode<synchronous>, transform_indices = @transform_3, window_bounds = array<i64: 128, 256>}, {pipeline_mode = #tpu.pipeline_mode<synchronous>, transform_indices = @transform_4, window_bounds = array<i64: 128, 256>}, {pipeline_mode = #tpu.pipeline_mode<synchronous>, transform_indices = @transform_5, window_bounds = array<i64: 1, 256>}, {pipeline_mode = #tpu.pipeline_mode<synchronous>, transform_indices = @transform_6, window_bounds = array<i64: 1, 256>}, {transform_indices = @transform_7, window_bounds = array<i64: 1, 1>}, {transform_indices = @transform_8, window_bounds = array<i64: 8, 1>}]} {
    %c0 = arith.constant 0 : index
    %c0_0 = arith.constant 0 : index
    %0 = vector.load %arg1[%c0, %c0_0] : memref<16x1024xbf16, #tpu.memory_space<vmem>>, vector<16x1024xbf16>
    %c0_1 = arith.constant 0 : index
    %c0_2 = arith.constant 0 : index
    %1 = vector.load %arg2[%c0_1, %c0_2] : memref<1024x128xbf16, #tpu.memory_space<vmem>>, vector<1024x128xbf16>
    %cst = arith.constant dense<0.000000e+00> : vector<16x128xf32>
    %2 = tpu.matmul %0, %1, %cst {dimension_numbers = #tpu.dot_dimension_numbers<[1], [0], [0], [1], [0, 0, 1, 1], [], []>} : vector<16x1024xbf16>, vector<1024x128xbf16>, vector<16x128xf32> -> vector<16x128xf32>
    %c0_3 = arith.constant 0 : index
    %c0_4 = arith.constant 0 : index
    %3 = vector.load %arg3[%c0_3, %c0_4] : memref<1x128xf32, #tpu.memory_space<vmem>>, vector<1x128xf32>
    %4 = vector.broadcast %3 : vector<1x128xf32> to vector<16x128xf32>
    %5 = arith.addf %2, %4 : vector<16x128xf32>
    %cst_5 = arith.constant 0.000000e+00 : f32
    %6 = vector.broadcast %cst_5 : f32 to vector<16x128xf32>
    %7 = arith.maximumf %5, %6 : vector<16x128xf32>
    %8 = vector.extract_strided_slice %7 {offsets = [0, 0], sizes = [8, 128], strides = [1, 1]} : vector<16x128xf32> to vector<8x128xf32>
    %9 = arith.truncf %8 : vector<8x128xf32> to vector<8x128xbf16>
    %10 = vector.extract_strided_slice %7 {offsets = [8, 0], sizes = [8, 128], strides = [1, 1]} : vector<16x128xf32> to vector<8x128xf32>
    %11 = arith.truncf %10 : vector<8x128xf32> to vector<8x128xbf16>
    %c0_6 = arith.constant 0 : index
    %c0_7 = arith.constant 0 : index
    %12 = vector.load %arg4[%c0_6, %c0_7] : memref<128x256xbf16, #tpu.memory_space<vmem>>, vector<128x256xbf16>
    %cst_8 = arith.constant dense<0.000000e+00> : vector<8x256xf32>
    %13 = tpu.matmul %9, %12, %cst_8 {dimension_numbers = #tpu.dot_dimension_numbers<[1], [0], [0], [1], [0, 0, 1, 1], [], []>} : vector<8x128xbf16>, vector<128x256xbf16>, vector<8x256xf32> -> vector<8x256xf32>
    %c0_9 = arith.constant 0 : index
    %c0_10 = arith.constant 0 : index
    %14 = vector.load %arg5[%c0_9, %c0_10] : memref<128x256xbf16, #tpu.memory_space<vmem>>, vector<128x256xbf16>
    %cst_11 = arith.constant dense<0.000000e+00> : vector<8x256xf32>
    %15 = tpu.matmul %11, %14, %cst_11 {dimension_numbers = #tpu.dot_dimension_numbers<[1], [0], [0], [1], [0, 0, 1, 1], [], []>} : vector<8x128xbf16>, vector<128x256xbf16>, vector<8x256xf32> -> vector<8x256xf32>
    %16 = arith.addf %13, %15 : vector<8x256xf32>
    %c0_12 = arith.constant 0 : index
    %c0_13 = arith.constant 0 : index
    %17 = vector.load %arg6[%c0_12, %c0_13] : memref<1x256xf32, #tpu.memory_space<vmem>>, vector<1x256xf32>
    %18 = vector.broadcast %17 : vector<1x256xf32> to vector<8x256xf32>
    %19 = arith.addf %16, %18 : vector<8x256xf32>
    %cst_14 = arith.constant 0.000000e+00 : f32
    %20 = vector.broadcast %cst_14 : f32 to vector<8x256xf32>
    %21 = arith.maximumf %19, %20 : vector<8x256xf32>
    %c0_15 = arith.constant 0 : index
    %c0_16 = arith.constant 0 : index
    %22 = vector.load %arg7[%c0_15, %c0_16] : memref<1x256xf32, #tpu.memory_space<vmem>>, vector<1x256xf32>
    %23 = vector.broadcast %22 : vector<1x256xf32> to vector<8x256xf32>
    %24 = arith.mulf %21, %23 : vector<8x256xf32>
    %cst_17 = arith.constant dense<0.000000e+00> : vector<8xf32>
    %25 = vector.multi_reduction <add>, %24, %cst_17 [1] : vector<8x256xf32> to vector<8xf32>
    %26 = vector.shape_cast %25 : vector<8xf32> to vector<8x1xf32>
    %c0_18 = arith.constant 0 : index
    %c0_19 = arith.constant 0 : index
    %27 = memref.load %arg8[%c0_18, %c0_19] : memref<1x1xf32, #tpu.memory_space<smem>>
    %28 = vector.broadcast %27 : f32 to vector<8x1xf32>
    %29 = arith.addf %26, %28 : vector<8x1xf32>
    %30 = arith.negf %29 : vector<8x1xf32>
    %31 = math.exp %30 : vector<8x1xf32>
    %cst_20 = arith.constant 1.000000e+00 : f32
    %32 = vector.broadcast %cst_20 : f32 to vector<8x1xf32>
    %33 = arith.addf %32, %31 : vector<8x1xf32>
    %34 = arith.divf %32, %33 : vector<8x1xf32>
    %c0_21 = arith.constant 0 : index
    %c0_22 = arith.constant 0 : index
    %35 = vector.load %arg9[%c0_21, %c0_22] : memref<8x1xf32, #tpu.memory_space<vmem>>, vector<8x1xf32>
    tpu.vector_store %arg9[%c0_21, %c0_22], %34 {strides = array<i32>} : memref<8x1xf32, #tpu.memory_space<vmem>>, vector<8x1xf32>,
    return
  }
  func.func @transform_0(%arg0: i32) -> (i32, i32) {
    %c0_i32 = arith.constant 0 : i32
    %c0_i32_0 = arith.constant 0 : i32
    return %arg0, %c0_i32 : i32, i32
  }
  func.func @transform_1(%arg0: i32) -> (i32, i32) {
    %c0_i32 = arith.constant 0 : i32
    %c0_i32_0 = arith.constant 0 : i32
    %c0_i32_1 = arith.constant 0 : i32
    return %c0_i32, %c0_i32_0 : i32, i32
  }
  func.func @transform_2(%arg0: i32) -> (i32, i32) {
    %c0_i32 = arith.constant 0 : i32
    %c0_i32_0 = arith.constant 0 : i32
    %c0_i32_1 = arith.constant 0 : i32
    return %c0_i32, %c0_i32_0 : i32, i32
  }
  func.func @transform_3(%arg0: i32) -> (i32, i32) {
    %c0_i32 = arith.constant 0 : i32
    %c0_i32_0 = arith.constant 0 : i32
    %c0_i32_1 = arith.constant 0 : i32
    return %c0_i32, %c0_i32_0 : i32, i32
  }
  func.func @transform_4(%arg0: i32) -> (i32, i32) {
    %c0_i32 = arith.constant 0 : i32
    %c0_i32_0 = arith.constant 0 : i32
    %c0_i32_1 = arith.constant 0 : i32
    return %c0_i32, %c0_i32_0 : i32, i32
  }
  func.func @transform_5(%arg0: i32) -> (i32, i32) {
    %c0_i32 = arith.constant 0 : i32
    %c0_i32_0 = arith.constant 0 : i32
    %c0_i32_1 = arith.constant 0 : i32
    return %c0_i32, %c0_i32_0 : i32, i32
  }
  func.func @transform_6(%arg0: i32) -> (i32, i32) {
    %c0_i32 = arith.constant 0 : i32
    %c0_i32_0 = arith.constant 0 : i32
    %c0_i32_1 = arith.constant 0 : i32
    return %c0_i32, %c0_i32_0 : i32, i32
  }
  func.func @transform_7(%arg0: i32) -> (i32, i32) {
    %c0_i32 = arith.constant 0 : i32
    %c0_i32_0 = arith.constant 0 : i32
    %c0_i32_1 = arith.constant 0 : i32
    return %c0_i32, %c0_i32_0 : i32, i32
  }
  func.func @transform_8(%arg0: i32) -> (i32, i32) {
    %c0_i32 = arith.constant 0 : i32
    %c0_i32_0 = arith.constant 0 : i32
    return %arg0, %c0_i32 : i32, i32
  }
}

</mosaic_0001>

<llo_original>
// kernel: tpu_custom_call.1
$region0: #{tpu_custom_call.1}
  #allocation0 [shape = 'u32[]', space=smem, size = 0x4, offset = 0x4, fixed_abs, tag = 'smem constant byte address 0x4 - core index']
  #allocation1 [shape = 'u32[144,128]{1,0:T(1,128)}', space=vmem, size = 0x12000, scoped, tag = 'internal scratch']
  #allocation2 [shape = 'f32[1,1]{1,0:T(1,128)S(6)}', space=smem, size = 0x200, scoped, tag = 'scoped memory for tpu_custom_call.1']
  %s0 = inlined_call_operand.hbm [shape: bf16[16,1024], index: 0, kind: input, shape index: {}]
  %s1 = inlined_call_operand.hbm [shape: bf16[1024,128], index: 1, kind: input, shape index: {}]
  %s2 = inlined_call_operand.vmem [shape: f32[1,128], index: 2, kind: input, shape index: {}]
  %s3 = inlined_call_operand.hbm [shape: bf16[128,256], index: 3, kind: input, shape index: {}]
  %s4 = inlined_call_operand.hbm [shape: bf16[128,256], index: 4, kind: input, shape index: {}]
  %s5 = inlined_call_operand.vmem [shape: f32[1,256], index: 5, kind: input, shape index: {}]
  %s6 = inlined_call_operand.vmem [shape: f32[1,256], index: 6, kind: input, shape index: {}]
  %s7 = inlined_call_operand.<no memory space> [shape: f32[1,1], index: 7, kind: input, shape index: {}]
  %s8 = inlined_call_operand.vmem [shape: f32[8,1], index: 8, kind: output, shape index: {}]
  %s9 = sld [smem:[#allocation0]]
  $region58: #{tpu_custom_call.1} parent=0
    _
  %s11 = ssub.s32 1, %s9
  %s12 = scalar_select 0, %s11, %s9
  %13 = sst [smem:[#allocation2]] %s7
  $region1: #{tpu_custom_call.1} parent=0
    #allocation3 [shape = 'u8[32768]{0}', space=vmem, size = 0x8000, scoped, tag = 'input window, operand 0, single buffered']
    #allocation4 [shape = 's32[1]{0}', space=sflag, size = 0x4, scoped, tag = 'scoped memory for tpu_custom_call.1']
    #allocation5 [shape = 'u8[262144]{0}', space=vmem, size = 0x40000, scoped, tag = 'input window, operand 1, single buffered']
    #allocation6 [shape = 's32[1]{0}', space=sflag, size = 0x4, scoped, tag = 'scoped memory for tpu_custom_call.1']
    #allocation7 [shape = 'u8[65536]{0}', space=vmem, size = 0x10000, scoped, tag = 'input window, operand 3, single buffered']
    #allocation8 [shape = 'u8[65536]{0}', space=vmem, size = 0x10000, scoped, tag = 'input window, operand 4, single buffered']
    #allocation9 [shape = 's32[1]{0}', space=sflag, size = 0x4, scoped, tag = 'scoped memory for tpu_custom_call.1']
    %14 = vsyncpa [#allocation4], 0
    %15 = vsyncpa [#allocation6], 0
    %16 = vsyncpa [#allocation9], 0
    // Predicated region
    $region2: #{tpu_custom_call.1} parent=1 // pred_check
      _
    $region3: #{tpu_custom_call.1} parent=1 // pred_check_branch
      %18 = sbr.rel (0) target = $region5
    $region4: #{tpu_custom_call.1} parent=1 // pred_region
      %s20 = ssub.s32 1024, 1024
      %21 = vsyncadd [#allocation4], %s20
      %s22 = sshll.u32 [#allocation3], 4
      %s23 = int_to_ptr.vmem [resolvable:$true] %s22
      %28 = dma.hbm_to_vmem [thread:$0]  %s0, 1024, %s23, [#allocation4], 512, 512, 32
    $region5: #{tpu_custom_call.1} parent=1 // pred_fallthru
      _
    // Predicated region
    $region6: #{tpu_custom_call.1} parent=1 // pred_check
      _
    $region7: #{tpu_custom_call.1} parent=1 // pred_check_branch
      %30 = sbr.rel (0) target = $region9
    $region8: #{tpu_custom_call.1} parent=1 // pred_region
      %s32 = ssub.s32 8192, 8192
      %33 = vsyncadd [#allocation6], %s32
      %s34 = sshll.u32 [#allocation5], 4
      %s35 = int_to_ptr.vmem [resolvable:$true] %s34
      %40 = dma.hbm_to_vmem [thread:$0]  %s1, 8192, %s35, [#allocation6], 64, 64, 4
    $region9: #{tpu_custom_call.1} parent=1 // pred_fallthru
      _
    // Predicated region
    $region10: #{tpu_custom_call.1} parent=1 // pred_check
      _
    $region11: #{tpu_custom_call.1} parent=1 // pred_check_branch
      %42 = sbr.rel (0) target = $region13
    $region12: #{tpu_custom_call.1} parent=1 // pred_region
      _
    $region13: #{tpu_custom_call.1} parent=1 // pred_fallthru
      _
    // Predicated region
    $region14: #{tpu_custom_call.1} parent=1 // pred_check
      _
    $region15: #{tpu_custom_call.1} parent=1 // pred_check_branch
      %44 = sbr.rel (0) target = $region17
    $region16: #{tpu_custom_call.1} parent=1 // pred_region
      %s46 = ssub.s32 2048, 2048
      %47 = vsyncadd [#allocation6], %s46
      %s48 = sshll.u32 [#allocation7], 4
      %s49 = int_to_ptr.vmem [resolvable:$true] %s48
      %54 = dma.hbm_to_vmem [thread:$0]  %s3, 2048, %s49, [#allocation6], 128, 128, 8
    $region17: #{tpu_custom_call.1} parent=1 // pred_fallthru
      _
    // Predicated region
    $region18: #{tpu_custom_call.1} parent=1 // pred_check
      _
    $region19: #{tpu_custom_call.1} parent=1 // pred_check_branch
      %56 = sbr.rel (0) target = $region21
    $region20: #{tpu_custom_call.1} parent=1 // pred_region
      %s58 = ssub.s32 2048, 2048
      %59 = vsyncadd [#allocation9], %s58
      %s60 = sshll.u32 [#allocation8], 4
      %s61 = int_to_ptr.vmem [resolvable:$true] %s60
      %66 = dma.hbm_to_vmem [thread:$0]  %s4, 2048, %s61, [#allocation9], 128, 128, 8
    $region21: #{tpu_custom_call.1} parent=1 // pred_fallthru
      _
    // Predicated region
    $region22: #{tpu_custom_call.1} parent=1 // pred_check
      _
    $region23: #{tpu_custom_call.1} parent=1 // pred_check_branch
      %68 = sbr.rel (0) target = $region25
    $region24: #{tpu_custom_call.1} parent=1 // pred_region
      _
    $region25: #{tpu_custom_call.1} parent=1 // pred_fallthru
      _
    // Predicated region
    $region26: #{tpu_custom_call.1} parent=1 // pred_check
      _
    $region27: #{tpu_custom_call.1} parent=1 // pred_check_branch
      %70 = sbr.rel (0) target = $region29
    $region28: #{tpu_custom_call.1} parent=1 // pred_region
      _
    $region29: #{tpu_custom_call.1} parent=1 // pred_fallthru
      _
    // Predicated region
    $region30: #{tpu_custom_call.1} parent=1 // pred_check
      _
    $region31: #{tpu_custom_call.1} parent=1 // pred_check_branch
      %72 = sbr.rel (0) target = $region33
    $region32: #{tpu_custom_call.1} parent=1 // pred_region
      _
    $region33: #{tpu_custom_call.1} parent=1 // pred_fallthru
      _
    // Predicated region
    $region34: #{tpu_custom_call.1} parent=1 // pred_check
      _
    $region35: #{tpu_custom_call.1} parent=1 // pred_check_branch
      %74 = sbr.rel (0) target = $region37
    $region36: #{tpu_custom_call.1} parent=1 // pred_region
      %75 = dma.done [#allocation4], 1024
    $region37: #{tpu_custom_call.1} parent=1 // pred_fallthru
      _
    // Predicated region
    $region38: #{tpu_custom_call.1} parent=1 // pred_check
      _
    $region39: #{tpu_custom_call.1} parent=1 // pred_check_branch
      %77 = sbr.rel (0) target = $region41
    $region40: #{tpu_custom_call.1} parent=1 // pred_region
      %78 = dma.done [#allocation6], 8192
    $region41: #{tpu_custom_call.1} parent=1 // pred_fallthru
      _
    // Predicated region
    $region42: #{tpu_custom_call.1} parent=1 // pred_check
      _
    $region43: #{tpu_custom_call.1} parent=1 // pred_check_branch
      %80 = sbr.rel (0) target = $region45
    $region44: #{tpu_custom_call.1} parent=1 // pred_region
      %81 = dma.done [#allocation6], 2048
    $region45: #{tpu_custom_call.1} parent=1 // pred_fallthru
      _
    // Predicated region
    $region46: #{tpu_custom_call.1} parent=1 // pred_check
      _
    $region47: #{tpu_custom_call.1} parent=1 // pred_check_branch
      %83 = sbr.rel (0) target = $region49
    $region48: #{tpu_custom_call.1} parent=1 // pred_region
      %84 = dma.done [#allocation9], 2048
    $region49: #{tpu_custom_call.1} parent=1 // pred_fallthru
      _
    %v86 = vld [vmem:[#allocation3] sm:$0xff]
    %v87 = vld [vmem:[#allocation3 + $0x8] sm:$0xff]
    %v88 = vld [vmem:[#allocation3 + $0x10] sm:$0xff]
    %v89 = vld [vmem:[#allocation3 + $0x18] sm:$0xff]
    %v90 = vld [vmem:[#allocation3 + $0x20] sm:$0xff]
    %v91 = vld [vmem:[#allocation3 + $0x28] sm:$0xff]
    %v92 = vld [vmem:[#allocation3 + $0x30] sm:$0xff]
    %v93 = vld [vmem:[#allocation3 + $0x38] sm:$0xff]
    %v94 = vld [vmem:[#allocation5] sm:$0xf]
    %v95 = vld [vmem:[#allocation5 + $0x4] sm:$0xf]
    %v96 = vld [vmem:[#allocation5 + $0x8] sm:$0xf]
    %v97 = vld [vmem:[#allocation5 + $0xc] sm:$0xf]
    %v98 = vld [vmem:[#allocation5 + $0x10] sm:$0xf]
    %v99 = vld [vmem:[#allocation5 + $0x14] sm:$0xf]
    %v100 = vld [vmem:[#allocation5 + $0x18] sm:$0xf]
    %v101 = vld [vmem:[#allocation5 + $0x1c] sm:$0xf]
    %v102 = vld [vmem:[#allocation5 + $0x20] sm:$0xf]
    %v103 = vld [vmem:[#allocation5 + $0x24] sm:$0xf]
    %v104 = vld [vmem:[#allocation5 + $0x28] sm:$0xf]
    %v105 = vld [vmem:[#allocation5 + $0x2c] sm:$0xf]
    %v106 = vld [vmem:[#allocation5 + $0x30] sm:$0xf]
    %v107 = vld [vmem:[#allocation5 + $0x34] sm:$0xf]
    %v108 = vld [vmem:[#allocation5 + $0x38] sm:$0xf]
    %v109 = vld [vmem:[#allocation5 + $0x3c] sm:$0xf]
    %v110 = vld [vmem:[#allocation5 + $0x40] sm:$0xf]
    %v111 = vld [vmem:[#allocation5 + $0x44] sm:$0xf]
    %v112 = vld [vmem:[#allocation5 + $0x48] sm:$0xf]
    %v113 = vld [vmem:[#allocation5 + $0x4c] sm:$0xf]
    %v114 = vld [vmem:[#allocation5 + $0x50] sm:$0xf]
    %v115 = vld [vmem:[#allocation5 + $0x54] sm:$0xf]
    %v116 = vld [vmem:[#allocation5 + $0x58] sm:$0xf]
    %v117 = vld [vmem:[#allocation5 + $0x5c] sm:$0xf]
    %v118 = vld [vmem:[#allocation5 + $0x60] sm:$0xf]
    %v119 = vld [vmem:[#allocation5 + $0x64] sm:$0xf]
    %v120 = vld [vmem:[#allocation5 + $0x68] sm:$0xf]
    %v121 = vld [vmem:[#allocation5 + $0x6c] sm:$0xf]
    %v122 = vld [vmem:[#allocation5 + $0x70] sm:$0xf]
    %v123 = vld [vmem:[#allocation5 + $0x74] sm:$0xf]
    %v124 = vld [vmem:[#allocation5 + $0x78] sm:$0xf]
    %v125 = vld [vmem:[#allocation5 + $0x7c] sm:$0xf]
    %v126 = vld [vmem:[#allocation5 + $0x80] sm:$0xf]
    %v127 = vld [vmem:[#allocation5 + $0x84] sm:$0xf]
    %v128 = vld [vmem:[#allocation5 + $0x88] sm:$0xf]
    %v129 = vld [vmem:[#allocation5 + $0x8c] sm:$0xf]
    %v130 = vld [vmem:[#allocation5 + $0x90] sm:$0xf]
    %v131 = vld [vmem:[#allocation5 + $0x94] sm:$0xf]
    %v132 = vld [vmem:[#allocation5 + $0x98] sm:$0xf]
    %v133 = vld [vmem:[#allocation5 + $0x9c] sm:$0xf]
    %v134 = vld [vmem:[#allocation5 + $0xa0] sm:$0xf]
    %v135 = vld [vmem:[#allocation5 + $0xa4] sm:$0xf]
    %v136 = vld [vmem:[#allocation5 + $0xa8] sm:$0xf]
    %v137 = vld [vmem:[#allocation5 + $0xac] sm:$0xf]
    %v138 = vld [vmem:[#allocation5 + $0xb0] sm:$0xf]
    %v139 = vld [vmem:[#allocation5 + $0xb4] sm:$0xf]
    %v140 = vld [vmem:[#allocation5 + $0xb8] sm:$0xf]
    %v141 = vld [vmem:[#allocation5 + $0xbc] sm:$0xf]
    %v142 = vld [vmem:[#allocation5 + $0xc0] sm:$0xf]
    %v143 = vld [vmem:[#allocation5 + $0xc4] sm:$0xf]
    %v144 = vld [vmem:[#allocation5 + $0xc8] sm:$0xf]
    %v145 = vld [vmem:[#allocation5 + $0xcc] sm:$0xf]
    %v146 = vld [vmem:[#allocation5 + $0xd0] sm:$0xf]
    %v147 = vld [vmem:[#allocation5 + $0xd4] sm:$0xf]
    %v148 = vld [vmem:[#allocation5 + $0xd8] sm:$0xf]
    %v149 = vld [vmem:[#allocation5 + $0xdc] sm:$0xf]
    %v150 = vld [vmem:[#allocation5 + $0xe0] sm:$0xf]
    %v151 = vld [vmem:[#allocation5 + $0xe4] sm:$0xf]
    %v152 = vld [vmem:[#allocation5 + $0xe8] sm:$0xf]
    %v153 = vld [vmem:[#allocation5 + $0xec] sm:$0xf]
    %v154 = vld [vmem:[#allocation5 + $0xf0] sm:$0xf]
    %v155 = vld [vmem:[#allocation5 + $0xf4] sm:$0xf]
    %v156 = vld [vmem:[#allocation5 + $0xf8] sm:$0xf]
    %v157 = vld [vmem:[#allocation5 + $0xfc] sm:$0xf]
    %v158 = vld [vmem:[#allocation5 + $0x100] sm:$0xf]
    %v159 = vld [vmem:[#allocation5 + $0x104] sm:$0xf]
    %v160 = vld [vmem:[#allocation5 + $0x108] sm:$0xf]
    %v161 = vld [vmem:[#allocation5 + $0x10c] sm:$0xf]
    %v162 = vld [vmem:[#allocation5 + $0x110] sm:$0xf]
    %v163 = vld [vmem:[#allocation5 + $0x114] sm:$0xf]
    %v164 = vld [vmem:[#allocation5 + $0x118] sm:$0xf]
    %v165 = vld [vmem:[#allocation5 + $0x11c] sm:$0xf]
    %v166 = vld [vmem:[#allocation5 + $0x120] sm:$0xf]
    %v167 = vld [vmem:[#allocation5 + $0x124] sm:$0xf]
    %v168 = vld [vmem:[#allocation5 + $0x128] sm:$0xf]
    %v169 = vld [vmem:[#allocation5 + $0x12c] sm:$0xf]
    %v170 = vld [vmem:[#allocation5 + $0x130] sm:$0xf]
    %v171 = vld [vmem:[#allocation5 + $0x134] sm:$0xf]
    %v172 = vld [vmem:[#allocation5 + $0x138] sm:$0xf]
    %v173 = vld [vmem:[#allocation5 + $0x13c] sm:$0xf]
    %v174 = vld [vmem:[#allocation5 + $0x140] sm:$0xf]
    %v175 = vld [vmem:[#allocation5 + $0x144] sm:$0xf]
    %v176 = vld [vmem:[#allocation5 + $0x148] sm:$0xf]
    %v177 = vld [vmem:[#allocation5 + $0x14c] sm:$0xf]
    %v178 = vld [vmem:[#allocation5 + $0x150] sm:$0xf]
    %v179 = vld [vmem:[#allocation5 + $0x154] sm:$0xf]
    %v180 = vld [vmem:[#allocation5 + $0x158] sm:$0xf]
    %v181 = vld [vmem:[#allocation5 + $0x15c] sm:$0xf]
    %v182 = vld [vmem:[#allocation5 + $0x160] sm:$0xf]
    %v183 = vld [vmem:[#allocation5 + $0x164] sm:$0xf]
    %v184 = vld [vmem:[#allocation5 + $0x168] sm:$0xf]
    %v185 = vld [vmem:[#allocation5 + $0x16c] sm:$0xf]
    %v186 = vld [vmem:[#allocation5 + $0x170] sm:$0xf]
    %v187 = vld [vmem:[#allocation5 + $0x174] sm:$0xf]
    %v188 = vld [vmem:[#allocation5 + $0x178] sm:$0xf]
    %v189 = vld [vmem:[#allocation5 + $0x17c] sm:$0xf]
    %v190 = vld [vmem:[#allocation5 + $0x180] sm:$0xf]
    %v191 = vld [vmem:[#allocation5 + $0x184] sm:$0xf]
    %v192 = vld [vmem:[#allocation5 + $0x188] sm:$0xf]
    %v193 = vld [vmem:[#allocation5 + $0x18c] sm:$0xf]
    %v194 = vld [vmem:[#allocation5 + $0x190] sm:$0xf]
    %v195 = vld [vmem:[#allocation5 + $0x194] sm:$0xf]
    %v196 = vld [vmem:[#allocation5 + $0x198] sm:$0xf]
    %v197 = vld [vmem:[#allocation5 + $0x19c] sm:$0xf]
    %v198 = vld [vmem:[#allocation5 + $0x1a0] sm:$0xf]
    %v199 = vld [vmem:[#allocation5 + $0x1a4] sm:$0xf]
    %v200 = vld [vmem:[#allocation5 + $0x1a8] sm:$0xf]
    %v201 = vld [vmem:[#allocation5 + $0x1ac] sm:$0xf]
    %v202 = vld [vmem:[#allocation5 + $0x1b0] sm:$0xf]
    %v203 = vld [vmem:[#allocation5 + $0x1b4] sm:$0xf]
    %v204 = vld [vmem:[#allocation5 + $0x1b8] sm:$0xf]
    %v205 = vld [vmem:[#allocation5 + $0x1bc] sm:$0xf]
    %v206 = vld [vmem:[#allocation5 + $0x1c0] sm:$0xf]
    %v207 = vld [vmem:[#allocation5 + $0x1c4] sm:$0xf]
    %v208 = vld [vmem:[#allocation5 + $0x1c8] sm:$0xf]
    %v209 = vld [vmem:[#allocation5 + $0x1cc] sm:$0xf]
    %v210 = vld [vmem:[#allocation5 + $0x1d0] sm:$0xf]
    %v211 = vld [vmem:[#allocation5 + $0x1d4] sm:$0xf]
    %v212 = vld [vmem:[#allocation5 + $0x1d8] sm:$0xf]
    %v213 = vld [vmem:[#allocation5 + $0x1dc] sm:$0xf]
    %v214 = vld [vmem:[#allocation5 + $0x1e0] sm:$0xf]
    %v215 = vld [vmem:[#allocation5 + $0x1e4] sm:$0xf]
    %v216 = vld [vmem:[#allocation5 + $0x1e8] sm:$0xf]
    %v217 = vld [vmem:[#allocation5 + $0x1ec] sm:$0xf]
    %v218 = vld [vmem:[#allocation5 + $0x1f0] sm:$0xf]
    %v219 = vld [vmem:[#allocation5 + $0x1f4] sm:$0xf]
    %v220 = vld [vmem:[#allocation5 + $0x1f8] sm:$0xf]
    %v221 = vld [vmem:[#allocation5 + $0x1fc] sm:$0xf]
    %v222 = vld [vmem:[%s2] sm:$0x1]
    %v224 = vlaneseq
    %v225 = vshrl.u32 %v224, 7
    %v226 = vsub.s32 0, %v225
    %v227 = vrot.slane %v222, %v226
    %v237 = vunpack.c.l.b16 %v86
    %v238 = vunpack.c.h.b16 %v86
    %v239 = vunpack.c.l.b16 %v87
    %v240 = vunpack.c.h.b16 %v87
    %v241 = vunpack.c.l.b16 %v88
    %v242 = vunpack.c.h.b16 %v88
    %v243 = vunpack.c.l.b16 %v89
    %v244 = vunpack.c.h.b16 %v89
    %v245 = vunpack.c.l.b16 %v90
    %v246 = vunpack.c.h.b16 %v90
    %v247 = vunpack.c.l.b16 %v91
    %v248 = vunpack.c.h.b16 %v91
    %v249 = vunpack.c.l.b16 %v92
    %v250 = vunpack.c.h.b16 %v92
    %v251 = vunpack.c.l.b16 %v93
    %v252 = vunpack.c.h.b16 %v93
    %v253 = vpack.c.b16 %v245, %v237
    %v254 = vpack.c.b16 %v246, %v238
    %v255 = vpack.c.b16 %v247, %v239
    %v256 = vpack.c.b16 %v248, %v240
    %v257 = vpack.c.b16 %v249, %v241
    %v258 = vpack.c.b16 %v250, %v242
    %v259 = vpack.c.b16 %v251, %v243
    %v260 = vpack.c.b16 %v252, %v244
    %v397 = vunpack.c.l.b16 %v94
    %v398 = vunpack.c.l.b16 %v95
    %v399 = vunpack.c.l.b16 %v96
    %v400 = vunpack.c.l.b16 %v97
    %v401 = vunpack.c.l.b16 %v98
    %v402 = vunpack.c.l.b16 %v99
    %v403 = vunpack.c.l.b16 %v100
    %v404 = vunpack.c.l.b16 %v101
    %v405 = vunpack.c.l.b16 %v102
    %v406 = vunpack.c.l.b16 %v103
    %v407 = vunpack.c.l.b16 %v104
    %v408 = vunpack.c.l.b16 %v105
    %v409 = vunpack.c.l.b16 %v106
    %v410 = vunpack.c.l.b16 %v107
    %v411 = vunpack.c.l.b16 %v108
    %v412 = vunpack.c.l.b16 %v109
    %v413 = vunpack.c.l.b16 %v110
    %v414 = vunpack.c.l.b16 %v111
    %v415 = vunpack.c.l.b16 %v112
    %v416 = vunpack.c.l.b16 %v113
    %v417 = vunpack.c.l.b16 %v114
    %v418 = vunpack.c.l.b16 %v115
    %v419 = vunpack.c.l.b16 %v116
    %v420 = vunpack.c.l.b16 %v117
    %v421 = vunpack.c.l.b16 %v118
    %v422 = vunpack.c.l.b16 %v119
    %v423 = vunpack.c.l.b16 %v120
    %v424 = vunpack.c.l.b16 %v121
    %v425 = vunpack.c.l.b16 %v122
    %v426 = vunpack.c.l.b16 %v123
    %v427 = vunpack.c.l.b16 %v124
    %v428 = vunpack.c.l.b16 %v125
    %v429 = vunpack.c.l.b16 %v126
    %v430 = vunpack.c.l.b16 %v127
    %v431 = vunpack.c.l.b16 %v128
    %v432 = vunpack.c.l.b16 %v129
    %v433 = vunpack.c.l.b16 %v130
    %v434 = vunpack.c.l.b16 %v131
    %v435 = vunpack.c.l.b16 %v132
    %v436 = vunpack.c.l.b16 %v133
    %v437 = vunpack.c.l.b16 %v134
    %v438 = vunpack.c.l.b16 %v135
    %v439 = vunpack.c.l.b16 %v136
    %v440 = vunpack.c.l.b16 %v137
    %v441 = vunpack.c.l.b16 %v138
    %v442 = vunpack.c.l.b16 %v139
    %v443 = vunpack.c.l.b16 %v140
    %v444 = vunpack.c.l.b16 %v141
    %v445 = vunpack.c.l.b16 %v142
    %v446 = vunpack.c.l.b16 %v143
    %v447 = vunpack.c.l.b16 %v144
    %v448 = vunpack.c.l.b16 %v145
    %v449 = vunpack.c.l.b16 %v146
    %v450 = vunpack.c.l.b16 %v147
    %v451 = vunpack.c.l.b16 %v148
    %v452 = vunpack.c.l.b16 %v149
    %v453 = vunpack.c.l.b16 %v150
    %v454 = vunpack.c.l.b16 %v151
    %v455 = vunpack.c.l.b16 %v152
    %v456 = vunpack.c.l.b16 %v153
    %v457 = vunpack.c.l.b16 %v154
    %v458 = vunpack.c.l.b16 %v155
    %v459 = vunpack.c.l.b16 %v156
    %v460 = vunpack.c.l.b16 %v157
    %v461 = vunpack.c.l.b16 %v158
    %v462 = vunpack.c.l.b16 %v159
    %v463 = vunpack.c.l.b16 %v160
    %v464 = vunpack.c.l.b16 %v161
    %v465 = vunpack.c.l.b16 %v162
    %v466 = vunpack.c.l.b16 %v163
    %v467 = vunpack.c.l.b16 %v164
    %v468 = vunpack.c.l.b16 %v165
    %v469 = vunpack.c.l.b16 %v166
    %v470 = vunpack.c.l.b16 %v167
    %v471 = vunpack.c.l.b16 %v168
    %v472 = vunpack.c.l.b16 %v169
    %v473 = vunpack.c.l.b16 %v170
    %v474 = vunpack.c.l.b16 %v171
    %v475 = vunpack.c.l.b16 %v172
    %v476 = vunpack.c.l.b16 %v173
    %v477 = vunpack.c.l.b16 %v174
    %v478 = vunpack.c.l.b16 %v175
    %v479 = vunpack.c.l.b16 %v176
    %v480 = vunpack.c.l.b16 %v177
    %v481 = vunpack.c.l.b16 %v178
    %v482 = vunpack.c.l.b16 %v179
    %v483 = vunpack.c.l.b16 %v180
    %v484 = vunpack.c.l.b16 %v181
    %v485 = vunpack.c.l.b16 %v182
    %v486 = vunpack.c.l.b16 %v183
    %v487 = vunpack.c.l.b16 %v184
    %v488 = vunpack.c.l.b16 %v185
    %v489 = vunpack.c.l.b16 %v186
    %v490 = vunpack.c.l.b16 %v187
    %v491 = vunpack.c.l.b16 %v188
    %v492 = vunpack.c.l.b16 %v189
    %v493 = vunpack.c.l.b16 %v190
    %v494 = vunpack.c.l.b16 %v191
    %v495 = vunpack.c.l.b16 %v192
    %v496 = vunpack.c.l.b16 %v193
    %v497 = vunpack.c.l.b16 %v194
    %v498 = vunpack.c.l.b16 %v195
    %v499 = vunpack.c.l.b16 %v196
    %v500 = vunpack.c.l.b16 %v197
    %v501 = vunpack.c.l.b16 %v198
    %v502 = vunpack.c.l.b16 %v199
    %v503 = vunpack.c.l.b16 %v200
    %v504 = vunpack.c.l.b16 %v201
    %v505 = vunpack.c.l.b16 %v202
    %v506 = vunpack.c.l.b16 %v203
    %v507 = vunpack.c.l.b16 %v204
    %v508 = vunpack.c.l.b16 %v205
    %v509 = vunpack.c.l.b16 %v206
    %v510 = vunpack.c.l.b16 %v207
    %v511 = vunpack.c.l.b16 %v208
    %v512 = vunpack.c.l.b16 %v209
    %v513 = vunpack.c.l.b16 %v210
    %v514 = vunpack.c.l.b16 %v211
    %v515 = vunpack.c.l.b16 %v212
    %v516 = vunpack.c.l.b16 %v213
    %v517 = vunpack.c.l.b16 %v214
    %v518 = vunpack.c.l.b16 %v215
    %v519 = vunpack.c.l.b16 %v216
    %v520 = vunpack.c.l.b16 %v217
    %v521 = vunpack.c.l.b16 %v218
    %v522 = vunpack.c.l.b16 %v219
    %v523 = vunpack.c.l.b16 %v220
    %v524 = vunpack.c.l.b16 %v221
    %v525 = vpack.c.b16 %v398, %v397
    %v526 = vpack.c.b16 %v400, %v399
    %v527 = vpack.c.b16 %v402, %v401
    %v528 = vpack.c.b16 %v404, %v403
    %v529 = vpack.c.b16 %v406, %v405
    %v530 = vpack.c.b16 %v408, %v407
    %v531 = vpack.c.b16 %v410, %v409
    %v532 = vpack.c.b16 %v412, %v411
    %v533 = vpack.c.b16 %v414, %v413
    %v534 = vpack.c.b16 %v416, %v415
    %v535 = vpack.c.b16 %v418, %v417
    %v536 = vpack.c.b16 %v420, %v419
    %v537 = vpack.c.b16 %v422, %v421
    %v538 = vpack.c.b16 %v424, %v423
    %v539 = vpack.c.b16 %v426, %v425
    %v540 = vpack.c.b16 %v428, %v427
    %v541 = vpack.c.b16 %v430, %v429
    %v542 = vpack.c.b16 %v432, %v431
    %v543 = vpack.c.b16 %v434, %v433
    %v544 = vpack.c.b16 %v436, %v435
    %v545 = vpack.c.b16 %v438, %v437
    %v546 = vpack.c.b16 %v440, %v439
    %v547 = vpack.c.b16 %v442, %v441
    %v548 = vpack.c.b16 %v444, %v443
    %v549 = vpack.c.b16 %v446, %v445
    %v550 = vpack.c.b16 %v448, %v447
    %v551 = vpack.c.b16 %v450, %v449
    %v552 = vpack.c.b16 %v452, %v451
    %v553 = vpack.c.b16 %v454, %v453
    %v554 = vpack.c.b16 %v456, %v455
    %v555 = vpack.c.b16 %v458, %v457
    %v556 = vpack.c.b16 %v460, %v459
    %v557 = vpack.c.b16 %v462, %v461
    %v558 = vpack.c.b16 %v464, %v463
    %v559 = vpack.c.b16 %v466, %v465
    %v560 = vpack.c.b16 %v468, %v467
    %v561 = vpack.c.b16 %v470, %v469
    %v562 = vpack.c.b16 %v472, %v471
    %v563 = vpack.c.b16 %v474, %v473
    %v564 = vpack.c.b16 %v476, %v475
    %v565 = vpack.c.b16 %v478, %v477
    %v566 = vpack.c.b16 %v480, %v479
    %v567 = vpack.c.b16 %v482, %v481
    %v568 = vpack.c.b16 %v484, %v483
    %v569 = vpack.c.b16 %v486, %v485
    %v570 = vpack.c.b16 %v488, %v487
    %v571 = vpack.c.b16 %v490, %v489
    %v572 = vpack.c.b16 %v492, %v491
    %v573 = vpack.c.b16 %v494, %v493
    %v574 = vpack.c.b16 %v496, %v495
    %v575 = vpack.c.b16 %v498, %v497
    %v576 = vpack.c.b16 %v500, %v499
    %v577 = vpack.c.b16 %v502, %v501
    %v578 = vpack.c.b16 %v504, %v503
    %v579 = vpack.c.b16 %v506, %v505
    %v580 = vpack.c.b16 %v508, %v507
    %v581 = vpack.c.b16 %v510, %v509
    %v582 = vpack.c.b16 %v512, %v511
    %v583 = vpack.c.b16 %v514, %v513
    %v584 = vpack.c.b16 %v516, %v515
    %v585 = vpack.c.b16 %v518, %v517
    %v586 = vpack.c.b16 %v520, %v519
    %v587 = vpack.c.b16 %v522, %v521
    %v588 = vpack.c.b16 %v524, %v523
    %653 = vmatprep.subr.bf16.mxu0 0
    %654 = vmatpush1.bf16.msra.mxu0 %v525
    %655 = vmatprep.subr.bf16.mxu0 0
    %656 = vmatpush1.bf16.msra.mxu0 %v526
    %657 = vmatprep.subr.bf16.mxu0 0
    %658 = vmatpush1.bf16.msra.mxu0 %v527
    %659 = vmatprep.subr.bf16.mxu0 0
    %660 = vmatpush1.bf16.msra.mxu0 %v528
    %661 = vmatprep.subr.bf16.mxu0 0
    %662 = vmatpush1.bf16.msra.mxu0 %v529
    %663 = vmatprep.subr.bf16.mxu0 0
    %664 = vmatpush1.bf16.msra.mxu0 %v530
    %665 = vmatprep.subr.bf16.mxu0 0
    %666 = vmatpush1.bf16.msra.mxu0 %v531
    %667 = vmatprep.subr.bf16.mxu0 0
    %668 = vmatpush1.bf16.msra.mxu0 %v532
    %669 = vmatprep.subr.bf16.mxu0 0
    %670 = vmatpush1.bf16.msra.mxu0 %v533
    %671 = vmatprep.subr.bf16.mxu0 0
    %672 = vmatpush1.bf16.msra.mxu0 %v534
    %673 = vmatprep.subr.bf16.mxu0 0
    %674 = vmatpush1.bf16.msra.mxu0 %v535
    %675 = vmatprep.subr.bf16.mxu0 0
    %676 = vmatpush1.bf16.msra.mxu0 %v536
    %677 = vmatprep.subr.bf16.mxu0 0
    %678 = vmatpush1.bf16.msra.mxu0 %v537
    %679 = vmatprep.subr.bf16.mxu0 0
    %680 = vmatpush1.bf16.msra.mxu0 %v538
    %681 = vmatprep.subr.bf16.mxu0 0
    %682 = vmatpush1.bf16.msra.mxu0 %v539
    %683 = vmatprep.subr.bf16.mxu0 0
    %684 = vmatpush1.bf16.msra.mxu0 %v540
    %685 = vmatprep.mubr.bf16.mxu0 %v254
    %686 = vmatmul.mubr.bf16.gmra.mrb[0].mxu0 %v253
    %v687 = vpop.f32.mrb[0].mxu0
    %v688 = vadd.f32 %v227, %v687
    %v689 = vpop.f32.mrb[0].mxu0
    %v690 = vpop.f32.mrb[0].mxu0
    %v691 = vadd.f32 %v227, %v690
    %v692 = vpop.f32.mrb[0].mxu0
    %693 = vdwg.mxu0
    %694 = vmatprep.subr.bf16.mxu0 0
    %695 = vmatpush1.bf16.msra.mxu0 %v541
    %696 = vmatprep.subr.bf16.mxu0 0
    %697 = vmatpush1.bf16.msra.mxu0 %v542
    %698 = vmatprep.subr.bf16.mxu0 0
    %699 = vmatpush1.bf16.msra.mxu0 %v543
    %700 = vmatprep.subr.bf16.mxu0 0
    %701 = vmatpush1.bf16.msra.mxu0 %v544
    %702 = vmatprep.subr.bf16.mxu0 0
    %703 = vmatpush1.bf16.msra.mxu0 %v545
    %704 = vmatprep.subr.bf16.mxu0 0
    %705 = vmatpush1.bf16.msra.mxu0 %v546
    %706 = vmatprep.subr.bf16.mxu0 0
    %707 = vmatpush1.bf16.msra.mxu0 %v547
    %708 = vmatprep.subr.bf16.mxu0 0
    %709 = vmatpush1.bf16.msra.mxu0 %v548
    %710 = vmatprep.subr.bf16.mxu0 0
    %711 = vmatpush1.bf16.msra.mxu0 %v549
    %712 = vmatprep.subr.bf16.mxu0 0
    %713 = vmatpush1.bf16.msra.mxu0 %v550
    %714 = vmatprep.subr.bf16.mxu0 0
    %715 = vmatpush1.bf16.msra.mxu0 %v551
    %716 = vmatprep.subr.bf16.mxu0 0
    %717 = vmatpush1.bf16.msra.mxu0 %v552
    %718 = vmatprep.subr.bf16.mxu0 0
    %719 = vmatpush1.bf16.msra.mxu0 %v553
    %720 = vmatprep.subr.bf16.mxu0 0
    %721 = vmatpush1.bf16.msra.mxu0 %v554
    %722 = vmatprep.subr.bf16.mxu0 0
    %723 = vmatpush1.bf16.msra.mxu0 %v555
    %724 = vmatprep.subr.bf16.mxu0 0
    %725 = vmatpush1.bf16.msra.mxu0 %v556
    %726 = vmatprep.mubr.bf16.mxu0 %v256
    %727 = vmatmul.mubr.bf16.gmra.mrb[0].mxu0 %v255
    %v728 = vpop.f32.mrb[0].mxu0
    %v729 = vadd.f32 %v688, %v728
    %v730 = vpop.f32.mrb[0].mxu0
    %v731 = vpop.f32.mrb[0].mxu0
    %v732 = vadd.f32 %v691, %v731
    %v733 = vpop.f32.mrb[0].mxu0
    %734 = vdwg.mxu0
    %735 = vmatprep.subr.bf16.mxu0 0
    %736 = vmatpush1.bf16.msra.mxu0 %v557
    %737 = vmatprep.subr.bf16.mxu0 0
    %738 = vmatpush1.bf16.msra.mxu0 %v558
    %739 = vmatprep.subr.bf16.mxu0 0
    %740 = vmatpush1.bf16.msra.mxu0 %v559
    %741 = vmatprep.subr.bf16.mxu0 0
    %742 = vmatpush1.bf16.msra.mxu0 %v560
    %743 = vmatprep.subr.bf16.mxu0 0
    %744 = vmatpush1.bf16.msra.mxu0 %v561
    %745 = vmatprep.subr.bf16.mxu0 0
    %746 = vmatpush1.bf16.msra.mxu0 %v562
    %747 = vmatprep.subr.bf16.mxu0 0
    %748 = vmatpush1.bf16.msra.mxu0 %v563
    %749 = vmatprep.subr.bf16.mxu0 0
    %750 = vmatpush1.bf16.msra.mxu0 %v564
    %751 = vmatprep.subr.bf16.mxu0 0
    %752 = vmatpush1.bf16.msra.mxu0 %v565
    %753 = vmatprep.subr.bf16.mxu0 0
    %754 = vmatpush1.bf16.msra.mxu0 %v566
    %755 = vmatprep.subr.bf16.mxu0 0
    %756 = vmatpush1.bf16.msra.mxu0 %v567
    %757 = vmatprep.subr.bf16.mxu0 0
    %758 = vmatpush1.bf16.msra.mxu0 %v568
    %759 = vmatprep.subr.bf16.mxu0 0
    %760 = vmatpush1.bf16.msra.mxu0 %v569
    %761 = vmatprep.subr.bf16.mxu0 0
    %762 = vmatpush1.bf16.msra.mxu0 %v570
    %763 = vmatprep.subr.bf16.mxu0 0
    %764 = vmatpush1.bf16.msra.mxu0 %v571
    %765 = vmatprep.subr.bf16.mxu0 0
    %766 = vmatpush1.bf16.msra.mxu0 %v572
    %767 = vmatprep.mubr.bf16.mxu0 %v258
    %768 = vmatmul.mubr.bf16.gmra.mrb[0].mxu0 %v257
    %v769 = vpop.f32.mrb[0].mxu0
    %v770 = vadd.f32 %v729, %v769
    %v771 = vpop.f32.mrb[0].mxu0
    %v772 = vpop.f32.mrb[0].mxu0
    %v773 = vadd.f32 %v732, %v772
    %v774 = vpop.f32.mrb[0].mxu0
    %775 = vdwg.mxu0
    %776 = vmatprep.subr.bf16.mxu0 0
    %777 = vmatpush1.bf16.msra.mxu0 %v573
    %778 = vmatprep.subr.bf16.mxu0 0
    %779 = vmatpush1.bf16.msra.mxu0 %v574
    %780 = vmatprep.subr.bf16.mxu0 0
    %781 = vmatpush1.bf16.msra.mxu0 %v575
    %782 = vmatprep.subr.bf16.mxu0 0
    %783 = vmatpush1.bf16.msra.mxu0 %v576
    %784 = vmatprep.subr.bf16.mxu0 0
    %785 = vmatpush1.bf16.msra.mxu0 %v577
    %786 = vmatprep.subr.bf16.mxu0 0
    %787 = vmatpush1.bf16.msra.mxu0 %v578
    %788 = vmatprep.subr.bf16.mxu0 0
    %789 = vmatpush1.bf16.msra.mxu0 %v579
    %790 = vmatprep.subr.bf16.mxu0 0
    %791 = vmatpush1.bf16.msra.mxu0 %v580
    %792 = vmatprep.subr.bf16.mxu0 0
    %793 = vmatpush1.bf16.msra.mxu0 %v581
    %794 = vmatprep.subr.bf16.mxu0 0
    %795 = vmatpush1.bf16.msra.mxu0 %v582
    %796 = vmatprep.subr.bf16.mxu0 0
    %797 = vmatpush1.bf16.msra.mxu0 %v583
    %798 = vmatprep.subr.bf16.mxu0 0
    %799 = vmatpush1.bf16.msra.mxu0 %v584
    %800 = vmatprep.subr.bf16.mxu0 0
    %801 = vmatpush1.bf16.msra.mxu0 %v585
    %802 = vmatprep.subr.bf16.mxu0 0
    %803 = vmatpush1.bf16.msra.mxu0 %v586
    %804 = vmatprep.subr.bf16.mxu0 0
    %805 = vmatpush1.bf16.msra.mxu0 %v587
    %806 = vmatprep.subr.bf16.mxu0 0
    %807 = vmatpush1.bf16.msra.mxu0 %v588
    %808 = vmatprep.mubr.bf16.mxu0 %v260
    %809 = vmatmul.mubr.bf16.gmra.mrb[0].mxu0 %v259
    %v810 = vpop.f32.mrb[0].mxu0
    %v811 = vadd.f32 %v770, %v810
    %v812 = vpop.f32.mrb[0].mxu0
    %v813 = vpop.f32.mrb[0].mxu0
    %v814 = vadd.f32 %v773, %v813
    %v815 = vpop.f32.mrb[0].mxu0
    %816 = vdwg.mxu0
    %v817 = vmax.f32 %v811, 0.0
    %v818 = vmax.f32 %v814, 0.0
    %v819 = vpack.c.bf16 %v817, %v817
    %v820 = vpack.c.bf16 %v818, %v818
    %v821 = vld [vmem:[#allocation7] sm:$0xff]
    %v822 = vld [vmem:[#allocation7 + $0x8] sm:$0xff]
    %v823 = vld [vmem:[#allocation7 + $0x10] sm:$0xff]
    %v824 = vld [vmem:[#allocation7 + $0x18] sm:$0xff]
    %v825 = vld [vmem:[#allocation7 + $0x20] sm:$0xff]
    %v826 = vld [vmem:[#allocation7 + $0x28] sm:$0xff]
    %v827 = vld [vmem:[#allocation7 + $0x30] sm:$0xff]
    %v828 = vld [vmem:[#allocation7 + $0x38] sm:$0xff]
    %v829 = vld [vmem:[#allocation7 + $0x40] sm:$0xff]
    %v830 = vld [vmem:[#allocation7 + $0x48] sm:$0xff]
    %v831 = vld [vmem:[#allocation7 + $0x50] sm:$0xff]
    %v832 = vld [vmem:[#allocation7 + $0x58] sm:$0xff]
    %v833 = vld [vmem:[#allocation7 + $0x60] sm:$0xff]
    %v834 = vld [vmem:[#allocation7 + $0x68] sm:$0xff]
    %v835 = vld [vmem:[#allocation7 + $0x70] sm:$0xff]
    %v836 = vld [vmem:[#allocation7 + $0x78] sm:$0xff]
    %v837 = vld [vmem:[#allocation8] sm:$0xff]
    %v838 = vld [vmem:[#allocation8 + $0x8] sm:$0xff]
    %v839 = vld [vmem:[#allocation8 + $0x10] sm:$0xff]
    %v840 = vld [vmem:[#allocation8 + $0x18] sm:$0xff]
    %v841 = vld [vmem:[#allocation8 + $0x20] sm:$0xff]
    %v842 = vld [vmem:[#allocation8 + $0x28] sm:$0xff]
    %v843 = vld [vmem:[#allocation8 + $0x30] sm:$0xff]
    %v844 = vld [vmem:[#allocation8 + $0x38] sm:$0xff]
    %v845 = vld [vmem:[#allocation8 + $0x40] sm:$0xff]
    %v846 = vld [vmem:[#allocation8 + $0x48] sm:$0xff]
    %v847 = vld [vmem:[#allocation8 + $0x50] sm:$0xff]
    %v848 = vld [vmem:[#allocation8 + $0x58] sm:$0xff]
    %v849 = vld [vmem:[#allocation8 + $0x60] sm:$0xff]
    %v850 = vld [vmem:[#allocation8 + $0x68] sm:$0xff]
    %v851 = vld [vmem:[#allocation8 + $0x70] sm:$0xff]
    %v852 = vld [vmem:[#allocation8 + $0x78] sm:$0xff]
    %v869 = vunpack.c.l.b16 %v837
    %v870 = vunpack.c.h.b16 %v837
    %v871 = vunpack.c.l.b16 %v838
    %v872 = vunpack.c.h.b16 %v838
    %v873 = vunpack.c.l.b16 %v839
    %v874 = vunpack.c.h.b16 %v839
    %v875 = vunpack.c.l.b16 %v840
    %v876 = vunpack.c.h.b16 %v840
    %v877 = vunpack.c.l.b16 %v841
    %v878 = vunpack.c.h.b16 %v841
    %v879 = vunpack.c.l.b16 %v842
    %v880 = vunpack.c.h.b16 %v842
    %v881 = vunpack.c.l.b16 %v843
    %v882 = vunpack.c.h.b16 %v843
    %v883 = vunpack.c.l.b16 %v844
    %v884 = vunpack.c.h.b16 %v844
    %v885 = vunpack.c.l.b16 %v845
    %v886 = vunpack.c.h.b16 %v845
    %v887 = vunpack.c.l.b16 %v846
    %v888 = vunpack.c.h.b16 %v846
    %v889 = vunpack.c.l.b16 %v847
    %v890 = vunpack.c.h.b16 %v847
    %v891 = vunpack.c.l.b16 %v848
    %v892 = vunpack.c.h.b16 %v848
    %v893 = vunpack.c.l.b16 %v849
    %v894 = vunpack.c.h.b16 %v849
    %v895 = vunpack.c.l.b16 %v850
    %v896 = vunpack.c.h.b16 %v850
    %v897 = vunpack.c.l.b16 %v851
    %v898 = vunpack.c.h.b16 %v851
    %v899 = vunpack.c.l.b16 %v852
    %v900 = vunpack.c.h.b16 %v852
    %v901 = vpack.c.b16 %v871, %v869
    %v902 = vpack.c.b16 %v872, %v870
    %v903 = vpack.c.b16 %v875, %v873
    %v904 = vpack.c.b16 %v876, %v874
    %v905 = vpack.c.b16 %v879, %v877
    %v906 = vpack.c.b16 %v880, %v878
    %v907 = vpack.c.b16 %v883, %v881
    %v908 = vpack.c.b16 %v884, %v882
    %v909 = vpack.c.b16 %v887, %v885
    %v910 = vpack.c.b16 %v888, %v886
    %v911 = vpack.c.b16 %v891, %v889
    %v912 = vpack.c.b16 %v892, %v890
    %v913 = vpack.c.b16 %v895, %v893
    %v914 = vpack.c.b16 %v896, %v894
    %v915 = vpack.c.b16 %v899, %v897
    %v916 = vpack.c.b16 %v900, %v898
    %933 = vmatprep.subr.bf16.mxu0 %v902
    %934 = vmatpush1.bf16.msra.mxu0 %v901
    %935 = vmatprep.subr.bf16.mxu0 %v904
    %936 = vmatpush1.bf16.msra.mxu0 %v903
    %937 = vmatprep.subr.bf16.mxu0 %v906
    %938 = vmatpush1.bf16.msra.mxu0 %v905
    %939 = vmatprep.subr.bf16.mxu0 %v908
    %940 = vmatpush1.bf16.msra.mxu0 %v907
    %941 = vmatprep.subr.bf16.mxu0 %v910
    %942 = vmatpush1.bf16.msra.mxu0 %v909
    %943 = vmatprep.subr.bf16.mxu0 %v912
    %944 = vmatpush1.bf16.msra.mxu0 %v911
    %945 = vmatprep.subr.bf16.mxu0 %v914
    %946 = vmatpush1.bf16.msra.mxu0 %v913
    %947 = vmatprep.subr.bf16.mxu0 %v916
    %948 = vmatpush1.bf16.msra.mxu0 %v915
    %949 = vmatprep.subr.bf16.mxu0 0
    %950 = vmatpush1.bf16.msra.mxu0 0
    %951 = vmatprep.subr.bf16.mxu0 0
    %952 = vmatpush1.bf16.msra.mxu0 0
    %953 = vmatprep.subr.bf16.mxu0 0
    %954 = vmatpush1.bf16.msra.mxu0 0
    %955 = vmatprep.subr.bf16.mxu0 0
    %956 = vmatpush1.bf16.msra.mxu0 0
    %957 = vmatprep.subr.bf16.mxu0 0
    %958 = vmatpush1.bf16.msra.mxu0 0
    %959 = vmatprep.subr.bf16.mxu0 0
    %960 = vmatpush1.bf16.msra.mxu0 0
    %961 = vmatprep.subr.bf16.mxu0 0
    %962 = vmatpush1.bf16.msra.mxu0 0
    %963 = vmatprep.subr.bf16.mxu0 0
    %964 = vmatpush1.bf16.msra.mxu0 0
    %965 = vmatprep.mubr.bf16.mxu0 0
    %966 = vmatmul.mubr.bf16.gmra.mrb[0].mxu0 %v820
    %v967 = vpop.f32.mrb[0].mxu0
    %v968 = vadd.f32 0.0, %v967
    %v969 = vpop.f32.mrb[0].mxu0
    %v970 = vadd.f32 0.0, %v969
    %v971 = vpop.f32.mrb[0].mxu0
    %v972 = vpop.f32.mrb[0].mxu0
    %973 = vdwg.mxu0
    %v990 = vunpack.c.l.b16 %v821
    %v991 = vunpack.c.h.b16 %v821
    %v992 = vunpack.c.l.b16 %v822
    %v993 = vunpack.c.h.b16 %v822
    %v994 = vunpack.c.l.b16 %v823
    %v995 = vunpack.c.h.b16 %v823
    %v996 = vunpack.c.l.b16 %v824
    %v997 = vunpack.c.h.b16 %v824
    %v998 = vunpack.c.l.b16 %v825
    %v999 = vunpack.c.h.b16 %v825
    %v1000 = vunpack.c.l.b16 %v826
    %v1001 = vunpack.c.h.b16 %v826
    %v1002 = vunpack.c.l.b16 %v827
    %v1003 = vunpack.c.h.b16 %v827
    %v1004 = vunpack.c.l.b16 %v828
    %v1005 = vunpack.c.h.b16 %v828
    %v1006 = vunpack.c.l.b16 %v829
    %v1007 = vunpack.c.h.b16 %v829
    %v1008 = vunpack.c.l.b16 %v830
    %v1009 = vunpack.c.h.b16 %v830
    %v1010 = vunpack.c.l.b16 %v831
    %v1011 = vunpack.c.h.b16 %v831
    %v1012 = vunpack.c.l.b16 %v832
    %v1013 = vunpack.c.h.b16 %v832
    %v1014 = vunpack.c.l.b16 %v833
    %v1015 = vunpack.c.h.b16 %v833
    %v1016 = vunpack.c.l.b16 %v834
    %v1017 = vunpack.c.h.b16 %v834
    %v1018 = vunpack.c.l.b16 %v835
    %v1019 = vunpack.c.h.b16 %v835
    %v1020 = vunpack.c.l.b16 %v836
    %v1021 = vunpack.c.h.b16 %v836
    %v1022 = vpack.c.b16 %v992, %v990
    %v1023 = vpack.c.b16 %v993, %v991
    %v1024 = vpack.c.b16 %v996, %v994
    %v1025 = vpack.c.b16 %v997, %v995
    %v1026 = vpack.c.b16 %v1000, %v998
    %v1027 = vpack.c.b16 %v1001, %v999
    %v1028 = vpack.c.b16 %v1004, %v1002
    %v1029 = vpack.c.b16 %v1005, %v1003
    %v1030 = vpack.c.b16 %v1008, %v1006
    %v1031 = vpack.c.b16 %v1009, %v1007
    %v1032 = vpack.c.b16 %v1012, %v1010
    %v1033 = vpack.c.b16 %v1013, %v1011
    %v1034 = vpack.c.b16 %v1016, %v1014
    %v1035 = vpack.c.b16 %v1017, %v1015
    %v1036 = vpack.c.b16 %v1020, %v1018
    %v1037 = vpack.c.b16 %v1021, %v1019
    %1054 = vmatprep.subr.bf16.mxu0 %v1023
    %1055 = vmatpush1.bf16.msra.mxu0 %v1022
    %1056 = vmatprep.subr.bf16.mxu0 %v1025
    %1057 = vmatpush1.bf16.msra.mxu0 %v1024
    %1058 = vmatprep.subr.bf16.mxu0 %v1027
    %1059 = vmatpush1.bf16.msra.mxu0 %v1026
    %1060 = vmatprep.subr.bf16.mxu0 %v1029
    %1061 = vmatpush1.bf16.msra.mxu0 %v1028
    %1062 = vmatprep.subr.bf16.mxu0 %v1031
    %1063 = vmatpush1.bf16.msra.mxu0 %v1030
    %1064 = vmatprep.subr.bf16.mxu0 %v1033
    %1065 = vmatpush1.bf16.msra.mxu0 %v1032
    %1066 = vmatprep.subr.bf16.mxu0 %v1035
    %1067 = vmatpush1.bf16.msra.mxu0 %v1034
    %1068 = vmatprep.subr.bf16.mxu0 %v1037
    %1069 = vmatpush1.bf16.msra.mxu0 %v1036
    %1070 = vmatprep.subr.bf16.mxu0 0
    %1071 = vmatpush1.bf16.msra.mxu0 0
    %1072 = vmatprep.subr.bf16.mxu0 0
    %1073 = vmatpush1.bf16.msra.mxu0 0
    %1074 = vmatprep.subr.bf16.mxu0 0
    %1075 = vmatpush1.bf16.msra.mxu0 0
    %1076 = vmatprep.subr.bf16.mxu0 0
    %1077 = vmatpush1.bf16.msra.mxu0 0
    %1078 = vmatprep.subr.bf16.mxu0 0
    %1079 = vmatpush1.bf16.msra.mxu0 0
    %1080 = vmatprep.subr.bf16.mxu0 0
    %1081 = vmatpush1.bf16.msra.mxu0 0
    %1082 = vmatprep.subr.bf16.mxu0 0
    %1083 = vmatpush1.bf16.msra.mxu0 0
    %1084 = vmatprep.subr.bf16.mxu0 0
    %1085 = vmatpush1.bf16.msra.mxu0 0
    %1086 = vmatprep.mubr.bf16.mxu0 0
    %1087 = vmatmul.mubr.bf16.gmra.mrb[0].mxu0 %v819
    %v1088 = vpop.f32.mrb[0].mxu0
    %v1089 = vadd.f32 %v968, %v1088
    %v1090 = vpop.f32.mrb[0].mxu0
    %v1091 = vadd.f32 %v970, %v1090
    %v1092 = vpop.f32.mrb[0].mxu0
    %v1093 = vpop.f32.mrb[0].mxu0
    %1094 = vdwg.mxu0
    %v1095 = vld [vmem:[%s5] sm:$0x3]
    %v1097 = vlaneseq
    %v1098 = vshrl.u32 %v1097, 7
    %v1099 = vsub.s32 0, %v1098
    %v1100 = vrot.slane %v1095, %v1099
    %v1101 = vlaneseq
    %v1102 = vshrl.u32 %v1101, 7
    %v1103 = vsub.s32 1, %v1102
    %v1104 = vrot.slane %v1095, %v1103
    %v1107 = vadd.f32 %v1089, %v1100
    %v1108 = vadd.f32 %v1091, %v1104
    %v1109 = vmax.f32 %v1107, 0.0
    %v1110 = vmax.f32 %v1108, 0.0
    %v1111 = vld [vmem:[%s6] sm:$0x3]
    %v1113 = vlaneseq
    %v1114 = vshrl.u32 %v1113, 7
    %v1115 = vsub.s32 0, %v1114
    %v1116 = vrot.slane %v1111, %v1115
    %v1117 = vlaneseq
    %v1118 = vshrl.u32 %v1117, 7
    %v1119 = vsub.s32 1, %v1118
    %v1120 = vrot.slane %v1111, %v1119
    %v1123 = vmul.f32 %v1109, %v1116
    %v1124 = vmul.f32 %v1110, %v1120
    %v1125 = vadd.f32 %v1123, %v1124
    %1126 = vadd.xlane.f32.xlu0 %v1125
    %v1127 = vpop.xlane.xlu0 %1126
    %s1128 = sld [smem:[#allocation2]]
    %v1129 = vstv %s1128
    %v1130 = vadd.f32 %v1127, %v1129
    %v1131 = vxor.u32 %v1130, 2147483648
    %v1132 = vmul.f32 %v1131, 1.442695
    %v1133 = vpow.pop %v1132
    %v1134 = vadd.f32 %v1133, 1.0
    %v1135 = vrcp.pop %v1134
    %v1136 = vmul.f32 1.0, %v1135
    %vm1137 = vcmask 7168
    %1138 = vst.msk [vmem:[%s8] sm:$0xff] %vm1137, %v1136
    // Predicated region
    $region50: #{tpu_custom_call.1} parent=1 // pred_check
      _
    $region51: #{tpu_custom_call.1} parent=1 // pred_check_branch
      %1140 = sbr.rel (0) target = $region53
    $region52: #{tpu_custom_call.1} parent=1 // pred_region
      _
    $region53: #{tpu_custom_call.1} parent=1 // pred_fallthru
      _
    // Predicated region
    $region54: #{tpu_custom_call.1} parent=1 // pred_check
      _
    $region55: #{tpu_custom_call.1} parent=1 // pred_check_branch
      %1142 = sbr.rel (0) target = $region57
    $region56: #{tpu_custom_call.1} parent=1 // pred_region
      _
    $region57: #{tpu_custom_call.1} parent=1 // pred_fallthru
      _
    %1143 = vsyncpa [#allocation4], 1
    %1144 = vsyncpa [#allocation6], 1
    %1145 = vsyncpa [#allocation9], 1

</llo_original>
